<compile_context>
chip_gen: v5e
topology: v5e:2x2
jax: 0.10.0
libtpu: 0.0.40
codegen_flags: <defaults>
</compile_context>

<pallas_src>
import jax
import jax.numpy as jnp
from jax.experimental import pallas as pl
from jax.experimental.pallas import tpu as pltpu


# Conservative resident-data budget: v7x has only 64 MiB VMEM (vs 128 MiB on
# v5e/v6e); leave room for double-buffered output tiles + compiler scratch.
_RESIDENT_VMEM_BUDGET = 40 * 1024 * 1024
_VMEM_LIMIT_BYTES = 48 * 1024 * 1024
_MAX_TB = 256


def _block_batch(b):
    """Rows per grid step (multiple of 8) and resulting grid size."""
    tb = min(_MAX_TB, b)
    tb = ((tb + 7) // 8) * 8
    grid = -(-b // tb)  # ceil div
    return tb, grid


def _fits_in_vmem(n, d, itemsize, tb):
    data_bytes = n * d * itemsize
    # double-buffered output tiles + slack for compiler scratch
    work_bytes = 2 * tb * d * itemsize + (1 << 20)
    return data_bytes + work_bytes <= _RESIDENT_VMEM_BUDGET


# ----------------------------------------------------------------------------
# Kernel
# ----------------------------------------------------------------------------
def _gather_kernel(idx_ref, data_ref, out_ref):
    """out block (TB, D): rows gathered from the VMEM-resident (N, D) dataset."""
    tb = out_ref.shape[0]
    n = data_ref.shape[0]
    base = pl.program_id(0) * tb

    @pl.loop(0, tb)
    def _(r):
        # clamp guards the zero-padded tail indices (rows sliced off by wrapper)
        idx = jnp.minimum(idx_ref[base + r], n - 1)
        out_ref[pl.ds(r, 1), :] = data_ref[pl.ds(idx, 1), :]


# ----------------------------------------------------------------------------
# Wrappers
# ----------------------------------------------------------------------------
def empirical_gather(data, indices):
    """out[i, :] = data[indices[i], :]  (torch.index_select on dim 0)."""
    n, d = data.shape
    b = indices.shape[0]
    itemsize = jnp.dtype(data.dtype).itemsize
    tb, grid = _block_batch(b)

    if not _fits_in_vmem(n, d, itemsize, tb):
        # TODO(synk): blocked manual row-DMA (make_async_copy) gather path for
        # datasets larger than the resident-VMEM budget.
        return jnp.take(data, indices, axis=0)

    b_pad = grid * tb
    idx_pad = jnp.pad(indices.astype(jnp.int32), (0, b_pad - b))

    out = pl.pallas_call(
        _gather_kernel,
        out_shape=jax.ShapeDtypeStruct((b_pad, d), data.dtype),
        grid_spec=pltpu.PrefetchScalarGridSpec(
            num_scalar_prefetch=1,
            grid=(grid,),
            in_specs=[
                # whole flattened dataset resident in VMEM (constant block index)
                pl.BlockSpec((n, d), lambda i, idx: (0, 0)),
            ],
            out_specs=pl.BlockSpec((tb, d), lambda i, idx: (i, 0)),
        ),
        compiler_params=pltpu.CompilerParams(
            dimension_semantics=("parallel",),
            vmem_limit_bytes=_VMEM_LIMIT_BYTES),
    )(idx_pad, data)
    return out[:b]


def empirical_gather_with_momentum(data, indices, key):
    """out[i] = concat([data[indices[i]], N(0,1) momentum], axis=-1)."""
    loc = empirical_gather(data, indices)
    # torch.randn_like(result): standard-normal momentum of the same shape.
    mom = jax.random.normal(key, loc.shape, dtype=loc.dtype)
    return jnp.concatenate([loc, mom], axis=-1)


# ----------------------------------------------------------------------------
# Module port
# ----------------------------------------------------------------------------
class EmpiricalDistribution:
    """JAX/Pallas port of utils.energy_tools.EmpiricalDistribution."""

    def __init__(self, data, add_momentum=False, replace=False):
        # data.view(-1, D), staged once as a device array
        self.data = jnp.asarray(data).reshape(-1, data.shape[-1])
        self.size = self.data.shape[0]
        self.add_momentum = add_momentum
        self.replace = replace

    def forward(self, batch_size, key, replace=None):
        if replace is None:
            replace = self.replace
        k_idx, k_mom = jax.random.split(key)
        # TODO(synk): np.random.choice / torch.randn_like are host-side RNG with
        # no direct Pallas equivalent; index sampling uses jax.random in glue,
        # the gather hot path runs inside the Pallas kernel.
        indices = jax.random.choice(
            k_idx, self.size, shape=(batch_size,), replace=replace
        ).astype(jnp.int32)
        if self.add_momentum:
            return empirical_gather_with_momentum(self.data, indices, k_mom), indices
        return empirical_gather(self.data, indices), indices


if __name__ == "__main__":
    key = jax.random.PRNGKey(0)
    k_data, k_fwd1, k_fwd2, k_fwd3 = jax.random.split(key, 4)

    # "dataset": shape (2, 8, 32) -> flattened internally to (16, 32)
    data = jax.random.normal(k_data, (2, 8, 32), dtype=jnp.float32)

    # path 1: plain empirical sampling (add_momentum=False, replace=False)
    dist = EmpiricalDistribution(data, add_momentum=False, replace=False)
    out, idx = dist.forward(8, k_fwd1)
    out = jax.block_until_ready(out)
    assert out.shape == (8, 32), out.shape
    assert jnp.allclose(out, dist.data[idx]), "gather mismatch"

    # path 1b: batch size not a multiple of the 8-row sublane block (tail padding)
    out_b, idx_b = dist.forward(5, k_fwd3)
    out_b = jax.block_until_ready(out_b)
    assert out_b.shape == (5, 32), out_b.shape
    assert jnp.allclose(out_b, dist.data[idx_b]), "gather (padded tail) mismatch"

    # path 2: with gaussian momentum concatenated along the last axis
    dist_m = EmpiricalDistribution(data, add_momentum=True, replace=True)
    out_m, idx_m = dist_m.forward(8, k_fwd2)
    out_m = jax.block_until_ready(out_m)
    assert out_m.shape == (8, 64), out_m.shape
    assert jnp.allclose(out_m[:, :32], dist_m.data[idx_m]), "gather (momentum path) mismatch"
    assert bool(jnp.isfinite(out_m).all()), "momentum not finite"

    print("KERNEL_OK")
</pallas_src>

<mosaic_0001>
module attributes {stable_mosaic.version = 11 : i64} {
  func.func @_gather_kernel(%arg0: i32, %arg1: memref<8xi32, #tpu.memory_space<smem>>, %arg2: memref<16x32xf32, #tpu.memory_space<vmem>>, %arg3: memref<8x32xf32, #tpu.memory_space<vmem>>) attributes {dimension_semantics = [#tpu.dimension_semantics<parallel>], iteration_bounds = array<i64: 1>, scalar_prefetch = 1 : i64, scratch_operands = 0 : i64, tpu.core_type = #tpu.core_type<tc>, window_params = [{pipeline_mode = #tpu.pipeline_mode<synchronous>, transform_indices = @transform_0, window_bounds = array<i64: 16, 32>}, {transform_indices = @transform_1, window_bounds = array<i64: 8, 32>}]} {
    %c8_i32 = arith.constant 8 : i32
    %0 = arith.muli %arg0, %c8_i32 : i32
    %c0_i32 = arith.constant 0 : i32
    %c8_i32_0 = arith.constant 8 : i32
    %1 = arith.addi %c0_i32, %c8_i32_0 : i32
    %c1_i32 = arith.constant 1 : i32
    scf.for %arg4 = %c0_i32 to %1 step %c1_i32  : i32 {
      %c1_i32_2 = arith.constant 1 : i32
      %2 = arith.muli %arg4, %c1_i32_2 : i32
      %c0_i32_3 = arith.constant 0 : i32
      %3 = arith.addi %c0_i32_3, %2 : i32
      %4 = arith.addi %0, %3 : i32
      %5 = arith.index_cast %4 : i32 to index
      %6 = memref.load %arg1[%5] : memref<8xi32, #tpu.memory_space<smem>>
      %c15_i32 = arith.constant 15 : i32
      %7 = arith.minsi %6, %c15_i32 : i32
      %8 = arith.index_cast %7 : i32 to index
      %c0 = arith.constant 0 : index
      %9 = vector.load %arg2[%8, %c0] : memref<16x32xf32, #tpu.memory_space<vmem>>, vector<1x32xf32>
      %10 = arith.index_cast %3 : i32 to index
      %c0_4 = arith.constant 0 : index
      %11 = vector.load %arg3[%10, %c0_4] : memref<8x32xf32, #tpu.memory_space<vmem>>, vector<1x32xf32>
      tpu.vector_store %arg3[%10, %c0_4], %9 {strides = array<i32>} : memref<8x32xf32, #tpu.memory_space<vmem>>, vector<1x32xf32>,
    }
    %c8_i32_1 = arith.constant 8 : i32
    return
  }
  func.func @transform_0(%arg0: i32, %arg1: memref<8xi32, #tpu.memory_space<smem>>) -> (i32, i32) {
    %c0_i32 = arith.constant 0 : i32
    %c0_i32_0 = arith.constant 0 : i32
    %c0_i32_1 = arith.constant 0 : i32
    return %c0_i32, %c0_i32_0 : i32, i32
  }
  func.func @transform_1(%arg0: i32, %arg1: memref<8xi32, #tpu.memory_space<smem>>) -> (i32, i32) {
    %c0_i32 = arith.constant 0 : i32
    %c0_i32_0 = arith.constant 0 : i32
    return %arg0, %c0_i32 : i32, i32
  }
}

</mosaic_0001>

<llo_original>
// kernel: tpu_custom_call.1
$region0: #{tpu_custom_call.1}
  #allocation0 [shape = 'u32[]', space=smem, size = 0x4, offset = 0x4, fixed_abs, tag = 'smem constant byte address 0x4 - core index']
  #allocation1 [shape = 'u32[72,128]{1,0:T(1,128)}', space=vmem, size = 0x9000, scoped, tag = 'internal scratch']
  #allocation2 [shape = 's32[1]{0}', space=sflag, size = 0x4, scoped, tag = 'scoped memory for tpu_custom_call.1']
  #allocation3 [shape = 'u8[512]{0}', space=smem, size = 0x200, scoped, tag = 'prefetched SMEM operand 0']
  %s0 = inlined_call_operand.hbm [shape: s32[8], index: 0, kind: input, shape index: {}]
  %s1 = inlined_call_operand.hbm [shape: f32[16,32], index: 1, kind: input, shape index: {}]
  %s2 = inlined_call_operand.hbm [shape: f32[8,32], index: 2, kind: output, shape index: {}]
  %s3 = sld [smem:[#allocation0]]
  $region25: #{tpu_custom_call.1} parent=0
    _
  %s5 = ssub.s32 1, %s3
  %s6 = scalar_select 0, %s5, %s3
  %s8 = sshll.u32 %s0, 4
  %s9 = int_to_ptr.hbm [resolvable:$true] %s8
  %11 = dma.hbm_to_smem %s9, 16, [#allocation3], [#allocation2]
  %13 = dma.done [#allocation2], 16
  %14 = sfence
  $region1: #{tpu_custom_call.1} parent=0
    #allocation4 [shape = 'u8[8192]{0}', space=vmem, size = 0x2000, scoped, tag = 'input window, operand 1, single buffered']
    #allocation5 [shape = 's32[1]{0}', space=sflag, size = 0x4, scoped, tag = 'scoped memory for tpu_custom_call.1']
    #allocation6 [shape = 's32[1]{0}', space=sflag, size = 0x4, scoped, tag = 'scoped memory for tpu_custom_call.1']
    #allocation7 [shape = 'u8[4096]{0}', space=vmem, size = 0x1000, scoped, tag = 'output window, operand 0, single buffered']
    %15 = vsyncpa [#allocation5], 0
    %16 = vsyncpa [#allocation6], 0
    // Predicated region
    $region2: #{tpu_custom_call.1} parent=1 // pred_check
      _
    $region3: #{tpu_custom_call.1} parent=1 // pred_check_branch
      %18 = sbr.rel (0) target = $region5
    $region4: #{tpu_custom_call.1} parent=1 // pred_region
      %20 = vsyncadd [#allocation5], 0
      %s21 = sshll.u32 %s1, 4
      %s22 = int_to_ptr.hbm [resolvable:$true] %s21
      %s23 = sshll.u32 [#allocation4], 4
      %s24 = int_to_ptr.vmem [resolvable:$true] %s23
      %29 = dma.hbm_to_vmem [thread:$0]  %s22, 256, %s24, [#allocation5], 128, 128, 8
    $region5: #{tpu_custom_call.1} parent=1 // pred_fallthru
      _
    // Predicated region
    $region6: #{tpu_custom_call.1} parent=1 // pred_check
      _
    $region7: #{tpu_custom_call.1} parent=1 // pred_check_branch
      %31 = sbr.rel (0) target = $region9
    $region8: #{tpu_custom_call.1} parent=1 // pred_region
      %33 = dma.done [#allocation5], 256
    $region9: #{tpu_custom_call.1} parent=1 // pred_fallthru
      _
    %s34 = smul.u32 0, 8
    loop: start=0, step=1, limit=8
    $region10: #{tpu_custom_call.1} parent=1 // loop_pre_header
      _
    $region11: #{tpu_custom_call.1} parent=1 // loop_header
      %s36 = sphi 0, %s40
      %p37 = scmp.ge.s32.totalorder %s36, 8
    $region12: #{tpu_custom_call.1} parent=1 // loop_header_branch
      %39 = sbr.rel (%p37) target = $region16
    $region13: #{tpu_custom_call.1} parent=1 // loop_body
      %s41 = sadd.s32 %s34, %s36
      %s42 = sld [smem:[#allocation3 + %s41]]
      %p43 = scmp.lt.s32.totalorder %s42, 15
      %s44 = scalar_select %p43, %s42, 15
      %s45 = scalar_lea.vmem [#allocation4], %s44
      %v46 = vld [vmem:[%s45] sm:$0x1]
      %s47 = scalar_lea.vmem [#allocation7], %s36
      %vm48 = vcmask 253952
      %49 = vst.msk [vmem:[%s47] sm:$0x1] %vm48, %v46
    $region14: #{tpu_custom_call.1} parent=1 // loop_footer
      %s40 = sadd.s32 1, %s36
    $region15: #{tpu_custom_call.1} parent=1 // loop_footer_branch
      %35 = sbr.rel target = $region11
    $region16: #{tpu_custom_call.1} parent=1 // loop_exit
      _
    // Predicated region
    $region17: #{tpu_custom_call.1} parent=1 // pred_check
      _
    $region18: #{tpu_custom_call.1} parent=1 // pred_check_branch
      %51 = sbr.rel (0) target = $region20
    $region19: #{tpu_custom_call.1} parent=1 // pred_region
      %53 = vsyncadd [#allocation6], 0
      %s55 = sshll.u32 [#allocation7], 4
      %s56 = int_to_ptr.vmem [resolvable:$true] %s55
      %s57 = sshll.u32 %s2, 4
      %s58 = int_to_ptr.hbm [resolvable:$true] %s57
      %60 = dma.vmem_to_hbm [thread:$0]  %s56, 128, %s58, [#allocation6]
    $region20: #{tpu_custom_call.1} parent=1 // pred_fallthru
      _
    // Predicated region
    $region21: #{tpu_custom_call.1} parent=1 // pred_check
      _
    $region22: #{tpu_custom_call.1} parent=1 // pred_check_branch
      %62 = sbr.rel (0) target = $region24
    $region23: #{tpu_custom_call.1} parent=1 // pred_region
      %64 = dma.done [#allocation6], 128
    $region24: #{tpu_custom_call.1} parent=1 // pred_fallthru
      _
    %65 = vsyncpa [#allocation5], 1
    %66 = vsyncpa [#allocation6], 1

</llo_original>
